<compile_context>
chip_gen: v5e
topology: v5e:2x2
jax: 0.10.0
libtpu: 0.0.40
codegen_flags: <defaults>
</compile_context>

<pallas_src>
import jax
import jax.numpy as jnp
from jax import lax
from jax.experimental import pallas as pl
from jax.experimental.pallas import tpu as pltpu


def _round_up(x, m):
    return ((x + m - 1) // m) * m


# ---------------------------------------------------------------------------
# Phase 1: hoisted input projection  gates_x = x @ W_ih + b   (one big matmul)
# ---------------------------------------------------------------------------
def _input_proj_kernel(x_ref, w_ih_ref, b_ref, gx_ref):
    """x_ref: (TM, Dp) time-major rows; w_ih_ref: (Dp, 4Hp); b_ref: (1, 4Hp)."""
    gx_ref[...] = (jnp.dot(x_ref[...], w_ih_ref[...],
                           preferred_element_type=jnp.float32)
                   + b_ref[...])


# ---------------------------------------------------------------------------
# Phase 2: serial LSTM recurrence over grid=(S,) + final Linear at the last step
# ---------------------------------------------------------------------------
def _recurrence_kernel(gx_ref, w_hh_ref, w_lin_ref, b_lin_ref, y_ref,
                       h_ref, c_ref):
    """gx_ref : (Bp, 4Hp)  precomputed x_t @ W_ih + b for this timestep
       w_hh   : (Hp, 4Hp)  hidden->gates weights, gate-k in lanes [k*Hp, k*Hp+H)
       w_lin  : (Hp, Op)   final linear weights (padded)
       b_lin  : (1, Op)
       y_ref  : (Bp, Op)   resident output block (written only at t == S-1)
       h_ref, c_ref: (Bp, Hp) f32 VMEM scratch, persistent across grid steps."""
    Hp = w_hh_ref.shape[0]
    t = pl.program_id(0)

    @pl.when(t == 0)
    def _():
        h_ref[...] = jnp.zeros_like(h_ref)
        c_ref[...] = jnp.zeros_like(c_ref)

    h = h_ref[...]
    gates = gx_ref[...] + jnp.dot(h, w_hh_ref[...],
                                  preferred_element_type=jnp.float32)
    # PyTorch gate order: i, f, g, o — each gate is a full 128-lane slab.
    i = jax.nn.sigmoid(gates[:, 0 * Hp:1 * Hp])
    f = jax.nn.sigmoid(gates[:, 1 * Hp:2 * Hp])
    g = jnp.tanh(gates[:, 2 * Hp:3 * Hp])
    o = jax.nn.sigmoid(gates[:, 3 * Hp:4 * Hp])
    c_new = f * c_ref[...] + i * g
    h_new = o * jnp.tanh(c_new)
    c_ref[...] = c_new
    h_ref[...] = h_new

    # dropout: num_layers == 1  =>  p = 0.0  =>  identity (inference no-op)
    @pl.when(t == pl.num_programs(0) - 1)
    def _():
        y_ref[...] = (jnp.dot(h_new, w_lin_ref[...],
                              preferred_element_type=jnp.float32)
                      + b_lin_ref[...])


def text_subnet_forward(x, params):
    """x: (B, S, D) float32 (batch_first, like the PyTorch module).

    Returns (B, O).  (PyTorch's h_n.squeeze() would also drop the batch dim when
    B == 1; here we always return (B, O).)
    """
    B, S, D = x.shape
    H = params["w_hh"].shape[0]
    O = params["w_lin"].shape[1]
    f32 = jnp.float32

    # Lane/sublane-aligned padded sizes.
    Bp = _round_up(B, 8)
    Dp = _round_up(D, 128)
    Hp = _round_up(H, 128)
    Op = _round_up(O, 128)
    G = 4 * Hp  # gate axis: gate k lives in lanes [k*Hp, k*Hp + H)

    def pad_gate_cols(w):  # (rows, 4H) -> (rows, G), each gate in its own slab
        out = jnp.zeros((w.shape[0], G), f32)
        for k in range(4):
            out = out.at[:, k * Hp:k * Hp + H].set(w[:, k * H:(k + 1) * H])
        return out

    w_ih_p = jnp.zeros((Dp, G), f32).at[:D].set(pad_gate_cols(params["w_ih"]))
    w_hh_p = jnp.zeros((Hp, G), f32).at[:H].set(pad_gate_cols(params["w_hh"]))
    b_p = pad_gate_cols(params["b"])                                   # (1, G)
    w_lin_p = jnp.zeros((Hp, Op), f32).at[:H, :O].set(params["w_lin"])
    b_lin_p = jnp.zeros((1, Op), f32).at[:, :O].set(params["b_lin"])

    # Time-major padded input, flattened to 2-D (Sp*Bp, Dp) so every block is a
    # plain (multiple-of-8, multiple-of-128) tile.  Pad + transpose fuse into a
    # single wrapper pass over the (tiny) x.
    SC = min(S, 128)                       # timesteps per phase-1 row tile
    n_tiles = pl.cdiv(S, SC)
    Sp = n_tiles * SC
    x_tm = jnp.zeros((Sp, Bp, Dp), f32).at[:S, :B, :D].set(
        jnp.transpose(x.astype(f32), (1, 0, 2)))
    x2 = x_tm.reshape(Sp * Bp, Dp)

    cp = dict(vmem_limit_bytes=32 * 1024 * 1024)

    # ---- Phase 1: one large MXU matmul for the input projection ----
    TM = SC * Bp
    gates_x = pl.pallas_call(
        _input_proj_kernel,
        out_shape=jax.ShapeDtypeStruct((Sp * Bp, G), f32),
        grid=(n_tiles,),
        in_specs=[pl.BlockSpec((TM, Dp), lambda i: (i, 0)),
                  pl.BlockSpec((Dp, G), lambda i: (0, 0)),
                  pl.BlockSpec((1, G), lambda i: (0, 0))],
        out_specs=pl.BlockSpec((TM, G), lambda i: (i, 0)),
        compiler_params=pltpu.CompilerParams(
            dimension_semantics=("parallel",), **cp),
    )(x2, w_ih_p, b_p)

    # ---- Phase 2: streamed recurrence + fused final Linear ----
    y_p = pl.pallas_call(
        _recurrence_kernel,
        out_shape=jax.ShapeDtypeStruct((Bp, Op), f32),
        grid=(S,),
        in_specs=[pl.BlockSpec((Bp, G), lambda t: (t, 0)),    # gates_x[t]
                  pl.BlockSpec((Hp, G), lambda t: (0, 0)),    # w_hh (resident)
                  pl.BlockSpec((Hp, Op), lambda t: (0, 0)),   # w_lin (resident)
                  pl.BlockSpec((1, Op), lambda t: (0, 0))],   # b_lin (resident)
        out_specs=pl.BlockSpec((Bp, Op), lambda t: (0, 0)),   # resident output
        scratch_shapes=[pltpu.VMEM((Bp, Hp), f32),            # h state
                        pltpu.VMEM((Bp, Hp), f32)],           # c state
        compiler_params=pltpu.CompilerParams(
            dimension_semantics=("arbitrary",), **cp),
    )(gates_x, w_hh_p, w_lin_p, b_lin_p)

    return y_p[:B, :O]


def make_params(key, in_size, hidden_size, out_size):
    """Deterministic synthetic parameters (PyTorch-default-style uniform init)."""
    k = jax.random.split(key, 6)
    s_rnn = 1.0 / jnp.sqrt(hidden_size)
    s_lin = 1.0 / jnp.sqrt(hidden_size)
    u = lambda kk, shape, s: jax.random.uniform(kk, shape, jnp.float32, -s, s)
    w_ih = u(k[0], (in_size, 4 * hidden_size), s_rnn)      # weight_ih_l0.T
    w_hh = u(k[1], (hidden_size, 4 * hidden_size), s_rnn)  # weight_hh_l0.T
    b_ih = u(k[2], (1, 4 * hidden_size), s_rnn)
    b_hh = u(k[3], (1, 4 * hidden_size), s_rnn)
    w_lin = u(k[4], (hidden_size, out_size), s_lin)        # linear_1.weight.T
    b_lin = u(k[5], (1, out_size), s_lin)
    return {"w_ih": w_ih, "w_hh": w_hh, "b": b_ih + b_hh,
            "w_lin": w_lin, "b_lin": b_lin}


def text_subnet_reference(x, params):
    """Pure-JAX reference of the same forward pass (for correctness check)."""
    B, S, D = x.shape
    H = params["w_hh"].shape[0]
    h = jnp.zeros((B, H), jnp.float32)
    c = jnp.zeros((B, H), jnp.float32)
    for t in range(S):
        gates = x[:, t, :] @ params["w_ih"] + h @ params["w_hh"] + params["b"]
        i = jax.nn.sigmoid(gates[:, 0 * H:1 * H])
        f = jax.nn.sigmoid(gates[:, 1 * H:2 * H])
        g = jnp.tanh(gates[:, 2 * H:3 * H])
        o = jax.nn.sigmoid(gates[:, 3 * H:4 * H])
        c = f * c + i * g
        h = o * jnp.tanh(c)
    return h @ params["w_lin"] + params["b_lin"]


if __name__ == "__main__":
    # Small shapes consistent with the module: (batch, seq, in_size)
    B, S, D = 2, 8, 16
    H, O = 32, 16

    key = jax.random.PRNGKey(0)
    kx, kp = jax.random.split(key)
    x = jax.random.normal(kx, (B, S, D), dtype=jnp.float32)
    params = make_params(kp, D, H, O)

    y = text_subnet_forward(x, params)
    y = jax.block_until_ready(y)

    y_ref = text_subnet_reference(x, params)
    assert y.shape == (B, O)
    assert jnp.allclose(y, y_ref, atol=1e-5, rtol=1e-5), "mismatch vs reference"

    print("KERNEL_OK")
</pallas_src>

<mosaic_0001>
module attributes {stable_mosaic.version = 11 : i64} {
  func.func @_input_proj_kernel(%arg0: i32, %arg1: memref<64x128xf32, #tpu.memory_space<vmem>>, %arg2: memref<128x512xf32, #tpu.memory_space<vmem>>, %arg3: memref<1x512xf32, #tpu.memory_space<vmem>>, %arg4: memref<64x512xf32, #tpu.memory_space<vmem>>) attributes {dimension_semantics = [#tpu.dimension_semantics<parallel>], iteration_bounds = array<i64: 1>, scalar_prefetch = 0 : i64, scratch_operands = 0 : i64, tpu.core_type = #tpu.core_type<tc>, window_params = [{transform_indices = @transform_0, window_bounds = array<i64: 64, 128>}, {pipeline_mode = #tpu.pipeline_mode<synchronous>, transform_indices = @transform_1, window_bounds = array<i64: 128, 512>}, {pipeline_mode = #tpu.pipeline_mode<synchronous>, transform_indices = @transform_2, window_bounds = array<i64: 1, 512>}, {transform_indices = @transform_3, window_bounds = array<i64: 64, 512>}]} {
    %c0 = arith.constant 0 : index
    %c0_0 = arith.constant 0 : index
    %0 = vector.load %arg1[%c0, %c0_0] : memref<64x128xf32, #tpu.memory_space<vmem>>, vector<64x128xf32>
    %c0_1 = arith.constant 0 : index
    %c0_2 = arith.constant 0 : index
    %1 = vector.load %arg2[%c0_1, %c0_2] : memref<128x512xf32, #tpu.memory_space<vmem>>, vector<128x512xf32>
    %cst = arith.constant dense<0.000000e+00> : vector<64x512xf32>
    %2 = tpu.matmul %0, %1, %cst {dimension_numbers = #tpu.dot_dimension_numbers<[1], [0], [0], [1], [0, 0, 1, 1], [], []>} : vector<64x128xf32>, vector<128x512xf32>, vector<64x512xf32> -> vector<64x512xf32>
    %c0_3 = arith.constant 0 : index
    %c0_4 = arith.constant 0 : index
    %3 = vector.load %arg3[%c0_3, %c0_4] : memref<1x512xf32, #tpu.memory_space<vmem>>, vector<1x512xf32>
    %4 = vector.broadcast %3 : vector<1x512xf32> to vector<64x512xf32>
    %5 = arith.addf %2, %4 : vector<64x512xf32>
    %c0_5 = arith.constant 0 : index
    %c0_6 = arith.constant 0 : index
    %6 = vector.load %arg4[%c0_5, %c0_6] : memref<64x512xf32, #tpu.memory_space<vmem>>, vector<64x512xf32>
    tpu.vector_store %arg4[%c0_5, %c0_6], %5 {strides = array<i32>} : memref<64x512xf32, #tpu.memory_space<vmem>>, vector<64x512xf32>,
    return
  }
  func.func @transform_0(%arg0: i32) -> (i32, i32) {
    %c0_i32 = arith.constant 0 : i32
    %c0_i32_0 = arith.constant 0 : i32
    return %arg0, %c0_i32 : i32, i32
  }
  func.func @transform_1(%arg0: i32) -> (i32, i32) {
    %c0_i32 = arith.constant 0 : i32
    %c0_i32_0 = arith.constant 0 : i32
    %c0_i32_1 = arith.constant 0 : i32
    return %c0_i32, %c0_i32_0 : i32, i32
  }
  func.func @transform_2(%arg0: i32) -> (i32, i32) {
    %c0_i32 = arith.constant 0 : i32
    %c0_i32_0 = arith.constant 0 : i32
    %c0_i32_1 = arith.constant 0 : i32
    return %c0_i32, %c0_i32_0 : i32, i32
  }
  func.func @transform_3(%arg0: i32) -> (i32, i32) {
    %c0_i32 = arith.constant 0 : i32
    %c0_i32_0 = arith.constant 0 : i32
    return %arg0, %c0_i32 : i32, i32
  }
}

</mosaic_0001>

<llo_original>
// kernel: tpu_custom_call.1
$region0: #{tpu_custom_call.1}
  #allocation0 [shape = 'u32[]', space=smem, size = 0x4, offset = 0x4, fixed_abs, tag = 'smem constant byte address 0x4 - core index']
  #allocation1 [shape = 'u32[72,128]{1,0:T(1,128)}', space=vmem, size = 0x9000, scoped, tag = 'internal scratch']
  %s0 = inlined_call_operand.hbm [shape: f32[64,128], index: 0, kind: input, shape index: {}]
  %s1 = inlined_call_operand.hbm [shape: f32[128,512], index: 1, kind: input, shape index: {}]
  %s2 = inlined_call_operand.hbm [shape: f32[1,512], index: 2, kind: input, shape index: {}]
  %s3 = inlined_call_operand.hbm [shape: f32[64,512], index: 3, kind: output, shape index: {}]
  %s4 = sld [smem:[#allocation0]]
  $region34: #{tpu_custom_call.1} parent=0
    _
  %s6 = ssub.s32 1, %s4
  %s7 = scalar_select 0, %s6, %s4
  $region1: #{tpu_custom_call.1} parent=0
    #allocation2 [shape = 'u8[32768]{0}', space=vmem, size = 0x8000, scoped, tag = 'input window, operand 0, single buffered']
    #allocation3 [shape = 's32[1]{0}', space=sflag, size = 0x4, scoped, tag = 'scoped memory for tpu_custom_call.1']
    #allocation4 [shape = 's32[1]{0}', space=sflag, size = 0x4, scoped, tag = 'scoped memory for tpu_custom_call.1']
    #allocation5 [shape = 'u8[262144]{0}', space=vmem, size = 0x40000, scoped, tag = 'input window, operand 1, single buffered']
    #allocation6 [shape = 's32[1]{0}', space=sflag, size = 0x4, scoped, tag = 'scoped memory for tpu_custom_call.1']
    #allocation7 [shape = 'u8[2048]{0}', space=vmem, size = 0x800, scoped, tag = 'input window, operand 2, single buffered']
    #allocation8 [shape = 'u8[131072]{0}', space=vmem, size = 0x20000, scoped, tag = 'output window, operand 0, single buffered']
    %8 = vsyncpa [#allocation3], 0
    %9 = vsyncpa [#allocation6], 0
    %10 = vsyncpa [#allocation4], 0
    // Predicated region
    $region2: #{tpu_custom_call.1} parent=1 // pred_check
      _
    $region3: #{tpu_custom_call.1} parent=1 // pred_check_branch
      %12 = sbr.rel (0) target = $region5
    $region4: #{tpu_custom_call.1} parent=1 // pred_region
      %14 = vsyncadd [#allocation3], 0
      %s15 = sshll.u32 %s0, 4
      %s16 = int_to_ptr.hbm [resolvable:$true] %s15
      %s17 = sshll.u32 [#allocation2], 4
      %s18 = int_to_ptr.vmem [resolvable:$true] %s17
      %23 = dma.hbm_to_vmem [thread:$0]  %s16, 1024, %s18, [#allocation3], 128, 128, 8
    $region5: #{tpu_custom_call.1} parent=1 // pred_fallthru
      _
    // Predicated region
    $region6: #{tpu_custom_call.1} parent=1 // pred_check
      _
    $region7: #{tpu_custom_call.1} parent=1 // pred_check_branch
      %25 = sbr.rel (0) target = $region9
    $region8: #{tpu_custom_call.1} parent=1 // pred_region
      %27 = vsyncadd [#allocation6], 0
      %s28 = sshll.u32 %s1, 4
      %s29 = int_to_ptr.hbm [resolvable:$true] %s28
      %s30 = sshll.u32 [#allocation5], 4
      %s31 = int_to_ptr.vmem [resolvable:$true] %s30
      %36 = dma.hbm_to_vmem [thread:$0]  %s29, 8192, %s31, [#allocation6], 512, 512, 32
    $region9: #{tpu_custom_call.1} parent=1 // pred_fallthru
      _
    // Predicated region
    $region10: #{tpu_custom_call.1} parent=1 // pred_check
      _
    $region11: #{tpu_custom_call.1} parent=1 // pred_check_branch
      %38 = sbr.rel (0) target = $region13
    $region12: #{tpu_custom_call.1} parent=1 // pred_region
      %40 = vsyncadd [#allocation6], 0
      %s42 = sshll.u32 %s2, 4
      %s43 = int_to_ptr.hbm [resolvable:$true] %s42
      %s44 = sshll.u32 [#allocation7], 4
      %s45 = int_to_ptr.vmem [resolvable:$true] %s44
      %47 = dma.hbm_to_vmem [thread:$0]  %s43, 64, %s45, [#allocation6]
    $region13: #{tpu_custom_call.1} parent=1 // pred_fallthru
      _
    // Predicated region
    $region14: #{tpu_custom_call.1} parent=1 // pred_check
      _
    $region15: #{tpu_custom_call.1} parent=1 // pred_check_branch
      %49 = sbr.rel (0) target = $region17
    $region16: #{tpu_custom_call.1} parent=1 // pred_region
      %51 = dma.done [#allocation3], 1024
    $region17: #{tpu_custom_call.1} parent=1 // pred_fallthru
      _
    // Predicated region
    $region18: #{tpu_custom_call.1} parent=1 // pred_check
      _
    $region19: #{tpu_custom_call.1} parent=1 // pred_check_branch
      %53 = sbr.rel (0) target = $region21
    $region20: #{tpu_custom_call.1} parent=1 // pred_region
      %55 = dma.done [#allocation6], 8192
    $region21: #{tpu_custom_call.1} parent=1 // pred_fallthru
      _
    // Predicated region
    $region22: #{tpu_custom_call.1} parent=1 // pred_check
      _
    $region23: #{tpu_custom_call.1} parent=1 // pred_check_branch
      %57 = sbr.rel (0) target = $region25
    $region24: #{tpu_custom_call.1} parent=1 // pred_region
      %59 = dma.done [#allocation6], 64
    $region25: #{tpu_custom_call.1} parent=1 // pred_fallthru
      _
    %v60 = vld [vmem:[#allocation2] sm:$0xff]
    %v61 = vld [vmem:[#allocation2 + $0x8] sm:$0xff]
    %v62 = vld [vmem:[#allocation2 + $0x10] sm:$0xff]
    %v63 = vld [vmem:[#allocation2 + $0x18] sm:$0xff]
    %v64 = vld [vmem:[#allocation2 + $0x20] sm:$0xff]
    %v65 = vld [vmem:[#allocation2 + $0x28] sm:$0xff]
    %v66 = vld [vmem:[#allocation2 + $0x30] sm:$0xff]
    %v67 = vld [vmem:[#allocation2 + $0x38] sm:$0xff]
    %v68 = vld [vmem:[#allocation5] sm:$0xff]
    %v69 = vld [vmem:[#allocation5 + $0x8] sm:$0xff]
    %v70 = vld [vmem:[#allocation5 + $0x10] sm:$0xff]
    %v71 = vld [vmem:[#allocation5 + $0x18] sm:$0xff]
    %v72 = vld [vmem:[#allocation5 + $0x20] sm:$0xff]
    %v73 = vld [vmem:[#allocation5 + $0x28] sm:$0xff]
    %v74 = vld [vmem:[#allocation5 + $0x30] sm:$0xff]
    %v75 = vld [vmem:[#allocation5 + $0x38] sm:$0xff]
    %v76 = vld [vmem:[#allocation5 + $0x40] sm:$0xff]
    %v77 = vld [vmem:[#allocation5 + $0x48] sm:$0xff]
    %v78 = vld [vmem:[#allocation5 + $0x50] sm:$0xff]
    %v79 = vld [vmem:[#allocation5 + $0x58] sm:$0xff]
    %v80 = vld [vmem:[#allocation5 + $0x60] sm:$0xff]
    %v81 = vld [vmem:[#allocation5 + $0x68] sm:$0xff]
    %v82 = vld [vmem:[#allocation5 + $0x70] sm:$0xff]
    %v83 = vld [vmem:[#allocation5 + $0x78] sm:$0xff]
    %v84 = vld [vmem:[#allocation5 + $0x80] sm:$0xff]
    %v85 = vld [vmem:[#allocation5 + $0x88] sm:$0xff]
    %v86 = vld [vmem:[#allocation5 + $0x90] sm:$0xff]
    %v87 = vld [vmem:[#allocation5 + $0x98] sm:$0xff]
    %v88 = vld [vmem:[#allocation5 + $0xa0] sm:$0xff]
    %v89 = vld [vmem:[#allocation5 + $0xa8] sm:$0xff]
    %v90 = vld [vmem:[#allocation5 + $0xb0] sm:$0xff]
    %v91 = vld [vmem:[#allocation5 + $0xb8] sm:$0xff]
    %v92 = vld [vmem:[#allocation5 + $0xc0] sm:$0xff]
    %v93 = vld [vmem:[#allocation5 + $0xc8] sm:$0xff]
    %v94 = vld [vmem:[#allocation5 + $0xd0] sm:$0xff]
    %v95 = vld [vmem:[#allocation5 + $0xd8] sm:$0xff]
    %v96 = vld [vmem:[#allocation5 + $0xe0] sm:$0xff]
    %v97 = vld [vmem:[#allocation5 + $0xe8] sm:$0xff]
    %v98 = vld [vmem:[#allocation5 + $0xf0] sm:$0xff]
    %v99 = vld [vmem:[#allocation5 + $0xf8] sm:$0xff]
    %v100 = vld [vmem:[#allocation5 + $0x100] sm:$0xff]
    %v101 = vld [vmem:[#allocation5 + $0x108] sm:$0xff]
    %v102 = vld [vmem:[#allocation5 + $0x110] sm:$0xff]
    %v103 = vld [vmem:[#allocation5 + $0x118] sm:$0xff]
    %v104 = vld [vmem:[#allocation5 + $0x120] sm:$0xff]
    %v105 = vld [vmem:[#allocation5 + $0x128] sm:$0xff]
    %v106 = vld [vmem:[#allocation5 + $0x130] sm:$0xff]
    %v107 = vld [vmem:[#allocation5 + $0x138] sm:$0xff]
    %v108 = vld [vmem:[#allocation5 + $0x140] sm:$0xff]
    %v109 = vld [vmem:[#allocation5 + $0x148] sm:$0xff]
    %v110 = vld [vmem:[#allocation5 + $0x150] sm:$0xff]
    %v111 = vld [vmem:[#allocation5 + $0x158] sm:$0xff]
    %v112 = vld [vmem:[#allocation5 + $0x160] sm:$0xff]
    %v113 = vld [vmem:[#allocation5 + $0x168] sm:$0xff]
    %v114 = vld [vmem:[#allocation5 + $0x170] sm:$0xff]
    %v115 = vld [vmem:[#allocation5 + $0x178] sm:$0xff]
    %v116 = vld [vmem:[#allocation5 + $0x180] sm:$0xff]
    %v117 = vld [vmem:[#allocation5 + $0x188] sm:$0xff]
    %v118 = vld [vmem:[#allocation5 + $0x190] sm:$0xff]
    %v119 = vld [vmem:[#allocation5 + $0x198] sm:$0xff]
    %v120 = vld [vmem:[#allocation5 + $0x1a0] sm:$0xff]
    %v121 = vld [vmem:[#allocation5 + $0x1a8] sm:$0xff]
    %v122 = vld [vmem:[#allocation5 + $0x1b0] sm:$0xff]
    %v123 = vld [vmem:[#allocation5 + $0x1b8] sm:$0xff]
    %v124 = vld [vmem:[#allocation5 + $0x1c0] sm:$0xff]
    %v125 = vld [vmem:[#allocation5 + $0x1c8] sm:$0xff]
    %v126 = vld [vmem:[#allocation5 + $0x1d0] sm:$0xff]
    %v127 = vld [vmem:[#allocation5 + $0x1d8] sm:$0xff]
    %v128 = vld [vmem:[#allocation5 + $0x1e0] sm:$0xff]
    %v129 = vld [vmem:[#allocation5 + $0x1e8] sm:$0xff]
    %v130 = vld [vmem:[#allocation5 + $0x1f0] sm:$0xff]
    %v131 = vld [vmem:[#allocation5 + $0x1f8] sm:$0xff]
    %v132 = vld [vmem:[#allocation7] sm:$0xf]
    %v134 = vperm.slane %v132, 0
    %v135 = vperm.slane %v132, 1
    %v136 = vperm.slane %v132, 2
    %v137 = vperm.slane %v132, 3
    %142 = vmatpush.msra.mxu0 %v128
    %143 = vmatpush.msra.mxu0 %v124
    %144 = vmatpush.msra.mxu0 %v120
    %145 = vmatpush.msra.mxu0 %v116
    %146 = vmatpush.msra.mxu0 %v112
    %147 = vmatpush.msra.mxu0 %v108
    %148 = vmatpush.msra.mxu0 %v104
    %149 = vmatpush.msra.mxu0 %v100
    %150 = vmatpush.msra.mxu0 %v96
    %151 = vmatpush.msra.mxu0 %v92
    %152 = vmatpush.msra.mxu0 %v88
    %153 = vmatpush.msra.mxu0 %v84
    %154 = vmatpush.msra.mxu0 %v80
    %155 = vmatpush.msra.mxu0 %v76
    %156 = vmatpush.msra.mxu0 %v72
    %157 = vmatpush.msra.mxu0 %v68
    %158 = vmatmul.f32.gmra.mxu0 %v60
    %v159 = vpop.f32.mrf.mxu0
    %v160 = vadd.f32 %v134, %v159
    %161 = vmatmul.f32.gmra.mxu0 %v61
    %v162 = vpop.f32.mrf.mxu0
    %v163 = vadd.f32 %v134, %v162
    %164 = vmatmul.f32.gmra.mxu0 %v62
    %v165 = vpop.f32.mrf.mxu0
    %v166 = vadd.f32 %v134, %v165
    %167 = vmatmul.f32.gmra.mxu0 %v63
    %v168 = vpop.f32.mrf.mxu0
    %v169 = vadd.f32 %v134, %v168
    %170 = vmatmul.f32.gmra.mxu0 %v64
    %v171 = vpop.f32.mrf.mxu0
    %v172 = vadd.f32 %v134, %v171
    %173 = vmatmul.f32.gmra.mxu0 %v65
    %v174 = vpop.f32.mrf.mxu0
    %v175 = vadd.f32 %v134, %v174
    %176 = vmatmul.f32.gmra.mxu0 %v66
    %v177 = vpop.f32.mrf.mxu0
    %v178 = vadd.f32 %v134, %v177
    %179 = vmatmul.f32.gmra.mxu0 %v67
    %v180 = vpop.f32.mrf.mxu0
    %v181 = vadd.f32 %v134, %v180
    %182 = vdwg.mxu0
    %183 = vmatpush.msra.mxu0 %v129
    %184 = vmatpush.msra.mxu0 %v125
    %185 = vmatpush.msra.mxu0 %v121
    %186 = vmatpush.msra.mxu0 %v117
    %187 = vmatpush.msra.mxu0 %v113
    %188 = vmatpush.msra.mxu0 %v109
    %189 = vmatpush.msra.mxu0 %v105
    %190 = vmatpush.msra.mxu0 %v101
    %191 = vmatpush.msra.mxu0 %v97
    %192 = vmatpush.msra.mxu0 %v93
    %193 = vmatpush.msra.mxu0 %v89
    %194 = vmatpush.msra.mxu0 %v85
    %195 = vmatpush.msra.mxu0 %v81
    %196 = vmatpush.msra.mxu0 %v77
    %197 = vmatpush.msra.mxu0 %v73
    %198 = vmatpush.msra.mxu0 %v69
    %199 = vmatmul.f32.gmra.mxu0 %v60
    %v200 = vpop.f32.mrf.mxu0
    %v201 = vadd.f32 %v135, %v200
    %202 = vmatmul.f32.gmra.mxu0 %v61
    %v203 = vpop.f32.mrf.mxu0
    %v204 = vadd.f32 %v135, %v203
    %205 = vmatmul.f32.gmra.mxu0 %v62
    %v206 = vpop.f32.mrf.mxu0
    %v207 = vadd.f32 %v135, %v206
    %208 = vmatmul.f32.gmra.mxu0 %v63
    %v209 = vpop.f32.mrf.mxu0
    %v210 = vadd.f32 %v135, %v209
    %211 = vmatmul.f32.gmra.mxu0 %v64
    %v212 = vpop.f32.mrf.mxu0
    %v213 = vadd.f32 %v135, %v212
    %214 = vmatmul.f32.gmra.mxu0 %v65
    %v215 = vpop.f32.mrf.mxu0
    %v216 = vadd.f32 %v135, %v215
    %217 = vmatmul.f32.gmra.mxu0 %v66
    %v218 = vpop.f32.mrf.mxu0
    %v219 = vadd.f32 %v135, %v218
    %220 = vmatmul.f32.gmra.mxu0 %v67
    %v221 = vpop.f32.mrf.mxu0
    %v222 = vadd.f32 %v135, %v221
    %223 = vdwg.mxu0
    %224 = vmatpush.msra.mxu0 %v130
    %225 = vmatpush.msra.mxu0 %v126
    %226 = vmatpush.msra.mxu0 %v122
    %227 = vmatpush.msra.mxu0 %v118
    %228 = vmatpush.msra.mxu0 %v114
    %229 = vmatpush.msra.mxu0 %v110
    %230 = vmatpush.msra.mxu0 %v106
    %231 = vmatpush.msra.mxu0 %v102
    %232 = vmatpush.msra.mxu0 %v98
    %233 = vmatpush.msra.mxu0 %v94
    %234 = vmatpush.msra.mxu0 %v90
    %235 = vmatpush.msra.mxu0 %v86
    %236 = vmatpush.msra.mxu0 %v82
    %237 = vmatpush.msra.mxu0 %v78
    %238 = vmatpush.msra.mxu0 %v74
    %239 = vmatpush.msra.mxu0 %v70
    %240 = vmatmul.f32.gmra.mxu0 %v60
    %v241 = vpop.f32.mrf.mxu0
    %v242 = vadd.f32 %v136, %v241
    %243 = vmatmul.f32.gmra.mxu0 %v61
    %v244 = vpop.f32.mrf.mxu0
    %v245 = vadd.f32 %v136, %v244
    %246 = vmatmul.f32.gmra.mxu0 %v62
    %v247 = vpop.f32.mrf.mxu0
    %v248 = vadd.f32 %v136, %v247
    %249 = vmatmul.f32.gmra.mxu0 %v63
    %v250 = vpop.f32.mrf.mxu0
    %v251 = vadd.f32 %v136, %v250
    %252 = vmatmul.f32.gmra.mxu0 %v64
    %v253 = vpop.f32.mrf.mxu0
    %v254 = vadd.f32 %v136, %v253
    %255 = vmatmul.f32.gmra.mxu0 %v65
    %v256 = vpop.f32.mrf.mxu0
    %v257 = vadd.f32 %v136, %v256
    %258 = vmatmul.f32.gmra.mxu0 %v66
    %v259 = vpop.f32.mrf.mxu0
    %v260 = vadd.f32 %v136, %v259
    %261 = vmatmul.f32.gmra.mxu0 %v67
    %v262 = vpop.f32.mrf.mxu0
    %v263 = vadd.f32 %v136, %v262
    %264 = vdwg.mxu0
    %265 = vmatpush.msra.mxu0 %v131
    %266 = vmatpush.msra.mxu0 %v127
    %267 = vmatpush.msra.mxu0 %v123
    %268 = vmatpush.msra.mxu0 %v119
    %269 = vmatpush.msra.mxu0 %v115
    %270 = vmatpush.msra.mxu0 %v111
    %271 = vmatpush.msra.mxu0 %v107
    %272 = vmatpush.msra.mxu0 %v103
    %273 = vmatpush.msra.mxu0 %v99
    %274 = vmatpush.msra.mxu0 %v95
    %275 = vmatpush.msra.mxu0 %v91
    %276 = vmatpush.msra.mxu0 %v87
    %277 = vmatpush.msra.mxu0 %v83
    %278 = vmatpush.msra.mxu0 %v79
    %279 = vmatpush.msra.mxu0 %v75
    %280 = vmatpush.msra.mxu0 %v71
    %281 = vmatmul.f32.gmra.mxu0 %v60
    %v282 = vpop.f32.mrf.mxu0
    %v283 = vadd.f32 %v137, %v282
    %284 = vmatmul.f32.gmra.mxu0 %v61
    %v285 = vpop.f32.mrf.mxu0
    %v286 = vadd.f32 %v137, %v285
    %287 = vmatmul.f32.gmra.mxu0 %v62
    %v288 = vpop.f32.mrf.mxu0
    %v289 = vadd.f32 %v137, %v288
    %290 = vmatmul.f32.gmra.mxu0 %v63
    %v291 = vpop.f32.mrf.mxu0
    %v292 = vadd.f32 %v137, %v291
    %293 = vmatmul.f32.gmra.mxu0 %v64
    %v294 = vpop.f32.mrf.mxu0
    %v295 = vadd.f32 %v137, %v294
    %296 = vmatmul.f32.gmra.mxu0 %v65
    %v297 = vpop.f32.mrf.mxu0
    %v298 = vadd.f32 %v137, %v297
    %299 = vmatmul.f32.gmra.mxu0 %v66
    %v300 = vpop.f32.mrf.mxu0
    %v301 = vadd.f32 %v137, %v300
    %302 = vmatmul.f32.gmra.mxu0 %v67
    %v303 = vpop.f32.mrf.mxu0
    %v304 = vadd.f32 %v137, %v303
    %305 = vdwg.mxu0
    %306 = vst [vmem:[#allocation8] sm:$0xff] %v160
    %307 = vst [vmem:[#allocation8 + $0x8] sm:$0xff] %v201
    %308 = vst [vmem:[#allocation8 + $0x10] sm:$0xff] %v242
    %309 = vst [vmem:[#allocation8 + $0x18] sm:$0xff] %v283
    %310 = vst [vmem:[#allocation8 + $0x20] sm:$0xff] %v163
    %311 = vst [vmem:[#allocation8 + $0x28] sm:$0xff] %v204
    %312 = vst [vmem:[#allocation8 + $0x30] sm:$0xff] %v245
    %313 = vst [vmem:[#allocation8 + $0x38] sm:$0xff] %v286
    %314 = vst [vmem:[#allocation8 + $0x40] sm:$0xff] %v166
    %315 = vst [vmem:[#allocation8 + $0x48] sm:$0xff] %v207
    %316 = vst [vmem:[#allocation8 + $0x50] sm:$0xff] %v248
    %317 = vst [vmem:[#allocation8 + $0x58] sm:$0xff] %v289
    %318 = vst [vmem:[#allocation8 + $0x60] sm:$0xff] %v169
    %319 = vst [vmem:[#allocation8 + $0x68] sm:$0xff] %v210
    %320 = vst [vmem:[#allocation8 + $0x70] sm:$0xff] %v251
    %321 = vst [vmem:[#allocation8 + $0x78] sm:$0xff] %v292
    %322 = vst [vmem:[#allocation8 + $0x80] sm:$0xff] %v172
    %323 = vst [vmem:[#allocation8 + $0x88] sm:$0xff] %v213
    %324 = vst [vmem:[#allocation8 + $0x90] sm:$0xff] %v254
    %325 = vst [vmem:[#allocation8 + $0x98] sm:$0xff] %v295
    %326 = vst [vmem:[#allocation8 + $0xa0] sm:$0xff] %v175
    %327 = vst [vmem:[#allocation8 + $0xa8] sm:$0xff] %v216
    %328 = vst [vmem:[#allocation8 + $0xb0] sm:$0xff] %v257
    %329 = vst [vmem:[#allocation8 + $0xb8] sm:$0xff] %v298
    %330 = vst [vmem:[#allocation8 + $0xc0] sm:$0xff] %v178
    %331 = vst [vmem:[#allocation8 + $0xc8] sm:$0xff] %v219
    %332 = vst [vmem:[#allocation8 + $0xd0] sm:$0xff] %v260
    %333 = vst [vmem:[#allocation8 + $0xd8] sm:$0xff] %v301
    %334 = vst [vmem:[#allocation8 + $0xe0] sm:$0xff] %v181
    %335 = vst [vmem:[#allocation8 + $0xe8] sm:$0xff] %v222
    %336 = vst [vmem:[#allocation8 + $0xf0] sm:$0xff] %v263
    %337 = vst [vmem:[#allocation8 + $0xf8] sm:$0xff] %v304
    // Predicated region
    $region26: #{tpu_custom_call.1} parent=1 // pred_check
      _
    $region27: #{tpu_custom_call.1} parent=1 // pred_check_branch
      %339 = sbr.rel (0) target = $region29
    $region28: #{tpu_custom_call.1} parent=1 // pred_region
      %341 = vsyncadd [#allocation4], 0
      %s342 = sshll.u32 [#allocation8], 4
      %s343 = int_to_ptr.vmem [resolvable:$true] %s342
      %s344 = sshll.u32 %s3, 4
      %s345 = int_to_ptr.hbm [resolvable:$true] %s344
      %350 = dma.vmem_to_hbm [thread:$0]  %s343, 4096, %s345, [#allocation4], 512, 512, 32
    $region29: #{tpu_custom_call.1} parent=1 // pred_fallthru
      _
    // Predicated region
    $region30: #{tpu_custom_call.1} parent=1 // pred_check
      _
    $region31: #{tpu_custom_call.1} parent=1 // pred_check_branch
      %352 = sbr.rel (0) target = $region33
    $region32: #{tpu_custom_call.1} parent=1 // pred_region
      %354 = dma.done [#allocation4], 4096
    $region33: #{tpu_custom_call.1} parent=1 // pred_fallthru
      _
    %355 = vsyncpa [#allocation3], 1
    %356 = vsyncpa [#allocation6], 1
    %357 = vsyncpa [#allocation4], 1

</llo_original>
